<compile_context>
chip_gen: v7x
topology: tpu7x:2x2x1
jax: 0.10.0
libtpu: 0.0.40
codegen_flags: <defaults>
</compile_context>

<pallas_src>
import functools

import jax
import jax.numpy as jnp
from jax.experimental import pallas as pl
from jax.experimental.pallas import tpu as pltpu


NC_PAD = 128  # lane-dense padded width for the (num_classes == 1) output


# ----------------------------------------------------------------------------
# Fused Pallas kernel: stem -> block -> conv_head -> pool -> classifier -> sigmoid
# ----------------------------------------------------------------------------
def fused_backbone_head_kernel(
    patches_ref,   # [bt*tile_s, Kp]   bf16   (im2col patch rows for this grid step)
    w_stem_ref,    # [Kp, C_stem]      bf16
    b_stem_ref,    # [1, C_stem]       f32
    w_blk_ref,     # [C_stem, C_blk]   bf16
    b_blk_ref,     # [1, C_blk]        f32
    w_head_ref,    # [C_blk, C_head]   bf16
    b_head_ref,    # [1, C_head]       f32
    w_cls_ref,     # [1, C_head]       f32   (transposed classifier row, num_classes == 1)
    b_cls_ref,     # SMEM [1, 1]       f32
    o_ref,         # [1, bt, NC_PAD]   f32   (lane-padded per-image outputs)
    acc_ref,       # VMEM [bt, C_head] f32   (pooled-sum accumulators, persist over spatial)
    *,
    s_real: int,       # real spatial size per image
    s_pad: int,        # padded spatial size per image (tile_s * n_s)
    bt: int,           # batch elements packed into one grid step
    apply_sigmoid: bool,
    bf16_silu: bool,   # compute the transcendental part of SiLU in bf16 (v6e/v7x EUP)
):
    s = pl.program_id(1)

    @pl.when(s == 0)
    def _init():
        acc_ref[...] = jnp.zeros_like(acc_ref)

    a = patches_ref[...]                                                 # [m_rows, Kp] bf16
    m_rows = a.shape[0]

    def silu(z):
        # z is f32 (MXU accumulation); do the sigmoid in bf16 where the EUP supports it.
        if bf16_silu:
            zb = z.astype(jnp.bfloat16)
            return zb * jax.nn.sigmoid(zb)
        return z * jax.nn.sigmoid(z)

    # stem: 3x3/s2 conv (matmul over im2col patches) + SiLU      (MXU bf16, f32 accum)
    z1 = jnp.dot(a, w_stem_ref[...], preferred_element_type=jnp.float32) + b_stem_ref[...]
    h1 = silu(z1).astype(jnp.bfloat16)

    # pointwise block: 1x1 conv + SiLU
    z2 = jnp.dot(h1, w_blk_ref[...], preferred_element_type=jnp.float32) + b_blk_ref[...]
    h2 = silu(z2).astype(jnp.bfloat16)

    # conv_head: 1x1 conv + SiLU; keep the product in f32 for the pooled accumulation.
    z3 = jnp.dot(h2, w_head_ref[...], preferred_element_type=jnp.float32) + b_head_ref[...]
    if bf16_silu:
        sig3 = jax.nn.sigmoid(z3.astype(jnp.bfloat16)).astype(jnp.float32)
    else:
        sig3 = jax.nn.sigmoid(z3)
    h3 = z3 * sig3                                                       # [m_rows, C_head] f32

    if s_pad != s_real:
        # Mask spatial padding rows (tail of each image) out of the pooled sum.
        row = jax.lax.broadcasted_iota(jnp.int32, (m_rows, 1), 0)
        row_in_img = (s * m_rows + row) % s_pad
        h3 = jnp.where(row_in_img < s_real, h3, 0.0)

    # Partial global-average-pool: per-image spatial sums accumulated in VMEM scratch.
    if bt == 1:
        acc_ref[...] += jnp.sum(h3, axis=0, keepdims=True)               # [1, C_head]
    else:
        rows_per_img = m_rows // bt
        partial = jnp.concatenate(
            [jnp.sum(h3[j * rows_per_img:(j + 1) * rows_per_img], axis=0, keepdims=True)
             for j in range(bt)], axis=0)                                # [bt, C_head]
        acc_ref[...] += partial

    @pl.when(s == pl.num_programs(1) - 1)
    def _finalize():
        pooled = acc_ref[...] * (1.0 / float(s_real))                    # [bt, C_head]
        # num_classes == 1 classifier as a VPU/XLU multiply-add reduce (no N=1 MXU dot).
        logit = (jnp.sum(pooled * w_cls_ref[...], axis=-1, keepdims=True)
                 + b_cls_ref[0, 0])                                      # [bt, 1]
        out = jax.nn.sigmoid(logit) if apply_sigmoid else logit
        o_ref[...] = jnp.broadcast_to(out[None, :, :], o_ref.shape)      # lane-dense store


# ----------------------------------------------------------------------------
# Tiling policy
# ----------------------------------------------------------------------------
def _choose_tiling(batch: int, s_real: int, *, max_tile: int = 2048, m_target: int = 512):
    """Returns (bt, tile_s, s_pad, n_s).

    tile_s is a multiple of 16 (bf16 sublane packing); S is padded to tile_s * n_s and the
    padded rows are masked inside the kernel.  For small images, bt > 1 batch elements are
    packed per grid step (bt divides batch, bt * tile_s <= m_target) so MXU M stays >= 128.
    """
    n_s = -(-s_real // max_tile)                 # ceil
    tile_s = -(-s_real // n_s)
    tile_s = ((tile_s + 15) // 16) * 16
    s_pad = tile_s * n_s
    bt = 1
    if n_s == 1 and tile_s < m_target:
        cap = max(1, m_target // tile_s)
        for d in range(1, batch + 1):
            if batch % d == 0 and d <= cap:
                bt = d
    return bt, tile_s, s_pad, n_s


def _supports_bf16_silu() -> bool:
    """v5e has no bf16 VPU/EUP: keep SiLU in f32 there; bf16 elsewhere."""
    try:
        kind = jax.devices()[0].device_kind.lower()
    except Exception:
        return True
    return not ("v5 lite" in kind or "v5e" in kind or "v5lite" in kind)


# ----------------------------------------------------------------------------
# pallas_call wrapper
# ----------------------------------------------------------------------------
def fused_forward(patches_flat_bf16, w_stem, b_stem, w_blk, b_blk, w_head, b_head,
                  w_cls_row, b_cls, *, batch, s_real, s_pad, tile_s, bt,
                  apply_sigmoid=True, bf16_silu=True):
    total_rows, Kp = patches_flat_bf16.shape
    assert total_rows == batch * s_pad
    C_stem = w_stem.shape[1]
    C_blk = w_blk.shape[1]
    C_head = w_head.shape[1]
    n_s = s_pad // tile_s
    n_b = batch // bt
    m_rows = bt * tile_s

    kernel = functools.partial(
        fused_backbone_head_kernel,
        s_real=s_real, s_pad=s_pad, bt=bt,
        apply_sigmoid=apply_sigmoid, bf16_silu=bf16_silu)

    # VMEM budget sized from the actual buffers (lane padding included), 2x margin,
    # clamped well below v7x's 64 MiB physical VMEM.
    patches_bytes = 2 * m_rows * max(Kp, 128) * 2            # double-buffered bf16 tile
    inter_bytes = m_rows * (3 * 128 + max(C_head, 128)) * 4  # f32 intermediates (lane padded)
    weights_bytes = 2 * 1024 * 1024                          # weights/biases/accumulator slack
    vmem_limit = int(min(32 * 1024 * 1024,
                         max(8 * 1024 * 1024,
                             2 * (patches_bytes + inter_bytes) + weights_bytes)))

    out_padded = pl.pallas_call(
        kernel,
        out_shape=jax.ShapeDtypeStruct((n_b, bt, NC_PAD), jnp.float32),
        grid_spec=pltpu.PrefetchScalarGridSpec(
            num_scalar_prefetch=0,
            grid=(n_b, n_s),
            in_specs=[
                # flat patch rows: block b covers images [b*bt, (b+1)*bt), spatial tile s.
                pl.BlockSpec((m_rows, Kp), lambda b, s: (b * n_s + s, 0)),
                pl.BlockSpec((Kp, C_stem), lambda b, s: (0, 0)),
                pl.BlockSpec((1, C_stem), lambda b, s: (0, 0)),
                pl.BlockSpec((C_stem, C_blk), lambda b, s: (0, 0)),
                pl.BlockSpec((1, C_blk), lambda b, s: (0, 0)),
                pl.BlockSpec((C_blk, C_head), lambda b, s: (0, 0)),
                pl.BlockSpec((1, C_head), lambda b, s: (0, 0)),
                pl.BlockSpec((1, C_head), lambda b, s: (0, 0)),          # w_cls row
                pl.BlockSpec(memory_space=pltpu.MemorySpace.SMEM),       # b_cls scalar
            ],
            out_specs=pl.BlockSpec((1, bt, NC_PAD), lambda b, s: (b, 0, 0)),
            scratch_shapes=[pltpu.VMEM((bt, C_head), jnp.float32)],
        ),
        compiler_params=pltpu.CompilerParams(
            # batch axis independent; spatial axis is a reduction into the VMEM accumulator.
            dimension_semantics=("parallel", "arbitrary"),
            vmem_limit_bytes=vmem_limit,
        ),
    )(patches_flat_bf16, w_stem, b_stem, w_blk, b_blk, w_head, b_head, w_cls_row, b_cls)
    return out_padded.reshape(batch, NC_PAD)[:, :1]                       # [B, 1]


# ----------------------------------------------------------------------------
# Glue: im2col for the 3x3 stride-2 stem conv (pure data movement, fused under jit)
# ----------------------------------------------------------------------------
def im2col_3x3_s2(x_nhwc):
    """x: [B, H, W, C] -> patches [B, (H//2)*(W//2), 9*C] (patch order kh, kw, c).

    Matches Conv2d(k=3, s=2, p=1) for even H/W.  Runs in the dtype of x (bf16 for the
    fused path, so the materialized HBM intermediate is half the size).
    """
    B, H, W, C = x_nhwc.shape
    Ho, Wo = H // 2, W // 2
    xp = jnp.pad(x_nhwc, ((0, 0), (1, 1), (1, 1), (0, 0)))
    cols = []
    for kh in range(3):
        for kw in range(3):
            cols.append(xp[:, kh:kh + 2 * Ho:2, kw:kw + 2 * Wo:2, :])
    patches = jnp.concatenate(cols, axis=-1)                             # [B, Ho, Wo, 9*C]
    return patches.reshape(B, Ho * Wo, 9 * C)


# ----------------------------------------------------------------------------
# Model: parameters + forward
# ----------------------------------------------------------------------------
def init_params(key, c_in=3, c_stem=32, c_block=48, c_head=128, num_classes=1):
    ks = jax.random.split(key, 8)
    scale = 0.1
    return {
        # stem: 3x3 conv, stride 2 (additive bias only; BN scale not folded - synthetic weights)
        "w_stem": scale * jax.random.normal(ks[0], (3, 3, c_in, c_stem), jnp.float32),
        "b_stem": scale * jax.random.normal(ks[1], (1, c_stem), jnp.float32),
        # pointwise block (1x1 conv)
        "w_blk": scale * jax.random.normal(ks[2], (c_stem, c_block), jnp.float32),
        "b_blk": scale * jax.random.normal(ks[3], (1, c_block), jnp.float32),
        # conv_head (1x1 conv) -- the CAM layer in the original module
        "w_head": scale * jax.random.normal(ks[4], (c_block, c_head), jnp.float32),
        "b_head": scale * jax.random.normal(ks[5], (1, c_head), jnp.float32),
        # classifier
        "w_cls": scale * jax.random.normal(ks[6], (c_head, num_classes), jnp.float32),
        "b_cls": scale * jax.random.normal(ks[7], (1, num_classes), jnp.float32),
    }


def timm_model_forward(params, x_nchw, activate=True, num_classes=1):
    """Mirrors TimmModel.forward: base(x) then sigmoid (num_classes == 1)."""
    if num_classes != 1:
        # TODO(synk): softmax path for num_classes > 1 not implemented in the fused kernel.
        raise NotImplementedError("only num_classes == 1 path is implemented")

    B, C, H, W = x_nchw.shape
    assert H % 2 == 0 and W % 2 == 0, "im2col_3x3_s2 matches Conv2d(k3,s2,p1) only for even H/W"

    # Cast to bf16 BEFORE im2col so the 9x-blown-up patches HBM intermediate is bf16.
    x = jnp.transpose(x_nchw, (0, 2, 3, 1)).astype(jnp.bfloat16)          # NCHW -> NHWC

    patches = im2col_3x3_s2(x)                                            # [B, S, 9*C] bf16
    S, K = patches.shape[1], patches.shape[2]
    Kp = ((K + 7) // 8) * 8                                               # 27 -> 32

    bt, tile_s, s_pad, _ = _choose_tiling(B, S)
    patches = jnp.pad(patches, ((0, 0), (0, s_pad - S), (0, Kp - K)))     # bf16 pad
    patches_flat = patches.reshape(B * s_pad, Kp)

    w_stem = params["w_stem"].reshape(K, -1)
    w_stem = jnp.pad(w_stem, ((0, Kp - K), (0, 0)))

    return fused_forward(
        patches_flat,
        w_stem.astype(jnp.bfloat16), params["b_stem"],
        params["w_blk"].astype(jnp.bfloat16), params["b_blk"],
        params["w_head"].astype(jnp.bfloat16), params["b_head"],
        params["w_cls"].T, params["b_cls"],                               # w_cls as [1, C_head]
        batch=B, s_real=S, s_pad=s_pad, tile_s=tile_s, bt=bt,
        apply_sigmoid=bool(activate), bf16_silu=_supports_bf16_silu(),
    )                                                                     # [B, 1]


def reference_forward(params, x_nchw, activate=True):
    """Pure-JAX f32 reference of the same forward (for a tolerance check)."""
    x = jnp.transpose(x_nchw, (0, 2, 3, 1)).astype(jnp.float32)
    patches = im2col_3x3_s2(x)                                            # [B, S, 27] f32

    def silu(z):
        return z * jax.nn.sigmoid(z)

    h = silu(patches @ params["w_stem"].reshape(-1, params["w_stem"].shape[-1])
             + params["b_stem"])
    h = silu(h @ params["w_blk"] + params["b_blk"])
    h = silu(h @ params["w_head"] + params["b_head"])
    pooled = jnp.mean(h, axis=1)                                          # [B, C_head]
    logit = pooled @ params["w_cls"] + params["b_cls"]
    return jax.nn.sigmoid(logit) if activate else logit


# ----------------------------------------------------------------------------
if __name__ == "__main__":
    key = jax.random.PRNGKey(0)
    pkey, xkey = jax.random.split(key)

    params = init_params(pkey)
    # Small input consistent with an image backbone: NCHW, 3 channels, 16x16.
    x = jax.random.normal(xkey, (2, 3, 16, 16), jnp.float32)

    fwd = jax.jit(timm_model_forward, static_argnames=("activate", "num_classes"))
    out = jax.block_until_ready(fwd(params, x, activate=True, num_classes=1))

    assert out.shape == (2, 1)
    assert bool(jnp.all((out >= 0.0) & (out <= 1.0)))                     # sigmoid output range

    # Tolerance check vs. the f32 pure-JAX reference (bf16 MXU / bf16 SiLU deviation).
    ref = jax.block_until_ready(reference_forward(params, x, activate=True))
    assert bool(jnp.all(jnp.abs(out - ref) < 2e-2)), (out, ref)

    print("KERNEL_OK")
</pallas_src>

<mosaic_0001>
module attributes {stable_mosaic.version = 11 : i64} {
  func.func @fused_backbone_head_kernel(%arg0: i32, %arg1: i32, %arg2: memref<128x32xbf16, #tpu.memory_space<vmem>>, %arg3: memref<32x32xbf16, #tpu.memory_space<vmem>>, %arg4: memref<1x32xf32, #tpu.memory_space<vmem>>, %arg5: memref<32x48xbf16, #tpu.memory_space<vmem>>, %arg6: memref<1x48xf32, #tpu.memory_space<vmem>>, %arg7: memref<48x128xbf16, #tpu.memory_space<vmem>>, %arg8: memref<1x128xf32, #tpu.memory_space<vmem>>, %arg9: memref<1x128xf32, #tpu.memory_space<vmem>>, %arg10: memref<1x1xf32, #tpu.memory_space<smem>>, %arg11: memref<1x2x128xf32, #tpu.memory_space<vmem>>, %arg12: memref<2x128xf32, #tpu.memory_space<vmem>>) attributes {dimension_semantics = [#tpu.dimension_semantics<parallel>, #tpu.dimension_semantics<arbitrary>], iteration_bounds = array<i64: 1, 1>, scalar_prefetch = 0 : i64, scratch_operands = 1 : i64, tpu.core_type = #tpu.core_type<tc>, window_params = [{transform_indices = @transform_0, window_bounds = array<i64: 128, 32>}, {pipeline_mode = #tpu.pipeline_mode<synchronous>, transform_indices = @transform_1, window_bounds = array<i64: 32, 32>}, {pipeline_mode = #tpu.pipeline_mode<synchronous>, transform_indices = @transform_2, window_bounds = array<i64: 1, 32>}, {pipeline_mode = #tpu.pipeline_mode<synchronous>, transform_indices = @transform_3, window_bounds = array<i64: 32, 48>}, {pipeline_mode = #tpu.pipeline_mode<synchronous>, transform_indices = @transform_4, window_bounds = array<i64: 1, 48>}, {pipeline_mode = #tpu.pipeline_mode<synchronous>, transform_indices = @transform_5, window_bounds = array<i64: 48, 128>}, {pipeline_mode = #tpu.pipeline_mode<synchronous>, transform_indices = @transform_6, window_bounds = array<i64: 1, 128>}, {pipeline_mode = #tpu.pipeline_mode<synchronous>, transform_indices = @transform_7, window_bounds = array<i64: 1, 128>}, {transform_indices = @transform_8, window_bounds = array<i64: 1, 1>}, {transform_indices = @transform_9, window_bounds = array<i64: 1, 2, 128>}]} {
    %c0_i32 = arith.constant 0 : i32
    %0 = arith.cmpi eq, %arg1, %c0_i32 : i32
    %1 = arith.extui %0 : i1 to i32
    %c0_i32_0 = arith.constant 0 : i32
    %2 = arith.cmpi ne, %1, %c0_i32_0 : i32
    scf.if %2 {
      %cst_27 = arith.constant 0.000000e+00 : f32
      %54 = vector.broadcast %cst_27 : f32 to vector<2x128xf32>
      %c0_28 = arith.constant 0 : index
      %c0_29 = arith.constant 0 : index
      %55 = vector.load %arg12[%c0_28, %c0_29] : memref<2x128xf32, #tpu.memory_space<vmem>>, vector<2x128xf32>
      tpu.vector_store %arg12[%c0_28, %c0_29], %54 {strides = array<i32>} : memref<2x128xf32, #tpu.memory_space<vmem>>, vector<2x128xf32>,
    } else {
    }
    %c0 = arith.constant 0 : index
    %c0_1 = arith.constant 0 : index
    %3 = vector.load %arg2[%c0, %c0_1] : memref<128x32xbf16, #tpu.memory_space<vmem>>, vector<128x32xbf16>
    %c0_2 = arith.constant 0 : index
    %c0_3 = arith.constant 0 : index
    %4 = vector.load %arg3[%c0_2, %c0_3] : memref<32x32xbf16, #tpu.memory_space<vmem>>, vector<32x32xbf16>
    %cst = arith.constant dense<0.000000e+00> : vector<128x32xf32>
    %5 = tpu.matmul %3, %4, %cst {dimension_numbers = #tpu.dot_dimension_numbers<[1], [0], [0], [1], [0, 0, 1, 1], [], []>} : vector<128x32xbf16>, vector<32x32xbf16>, vector<128x32xf32> -> vector<128x32xf32>
    %c0_4 = arith.constant 0 : index
    %c0_5 = arith.constant 0 : index
    %6 = vector.load %arg4[%c0_4, %c0_5] : memref<1x32xf32, #tpu.memory_space<vmem>>, vector<1x32xf32>
    %7 = vector.broadcast %6 : vector<1x32xf32> to vector<128x32xf32>
    %8 = arith.addf %5, %7 : vector<128x32xf32>
    %9 = arith.truncf %8 : vector<128x32xf32> to vector<128x32xbf16>
    %10 = arith.negf %9 : vector<128x32xbf16>
    %11 = math.exp %10 : vector<128x32xbf16>
    %cst_6 = arith.constant 1.000000e+00 : bf16
    %12 = vector.broadcast %cst_6 : bf16 to vector<128x32xbf16>
    %13 = arith.addf %12, %11 : vector<128x32xbf16>
    %14 = arith.divf %12, %13 : vector<128x32xbf16>
    %15 = arith.mulf %9, %14 : vector<128x32xbf16>
    %c0_7 = arith.constant 0 : index
    %c0_8 = arith.constant 0 : index
    %16 = vector.load %arg5[%c0_7, %c0_8] : memref<32x48xbf16, #tpu.memory_space<vmem>>, vector<32x48xbf16>
    %cst_9 = arith.constant dense<0.000000e+00> : vector<128x48xf32>
    %17 = tpu.matmul %15, %16, %cst_9 {dimension_numbers = #tpu.dot_dimension_numbers<[1], [0], [0], [1], [0, 0, 1, 1], [], []>} : vector<128x32xbf16>, vector<32x48xbf16>, vector<128x48xf32> -> vector<128x48xf32>
    %c0_10 = arith.constant 0 : index
    %c0_11 = arith.constant 0 : index
    %18 = vector.load %arg6[%c0_10, %c0_11] : memref<1x48xf32, #tpu.memory_space<vmem>>, vector<1x48xf32>
    %19 = vector.broadcast %18 : vector<1x48xf32> to vector<128x48xf32>
    %20 = arith.addf %17, %19 : vector<128x48xf32>
    %21 = arith.truncf %20 : vector<128x48xf32> to vector<128x48xbf16>
    %22 = arith.negf %21 : vector<128x48xbf16>
    %23 = math.exp %22 : vector<128x48xbf16>
    %cst_12 = arith.constant 1.000000e+00 : bf16
    %24 = vector.broadcast %cst_12 : bf16 to vector<128x48xbf16>
    %25 = arith.addf %24, %23 : vector<128x48xbf16>
    %26 = arith.divf %24, %25 : vector<128x48xbf16>
    %27 = arith.mulf %21, %26 : vector<128x48xbf16>
    %c0_13 = arith.constant 0 : index
    %c0_14 = arith.constant 0 : index
    %28 = vector.load %arg7[%c0_13, %c0_14] : memref<48x128xbf16, #tpu.memory_space<vmem>>, vector<48x128xbf16>
    %cst_15 = arith.constant dense<0.000000e+00> : vector<128x128xf32>
    %29 = tpu.matmul %27, %28, %cst_15 {dimension_numbers = #tpu.dot_dimension_numbers<[1], [0], [0], [1], [0, 0, 1, 1], [], []>} : vector<128x48xbf16>, vector<48x128xbf16>, vector<128x128xf32> -> vector<128x128xf32>
    %c0_16 = arith.constant 0 : index
    %c0_17 = arith.constant 0 : index
    %30 = vector.load %arg8[%c0_16, %c0_17] : memref<1x128xf32, #tpu.memory_space<vmem>>, vector<1x128xf32>
    %31 = vector.broadcast %30 : vector<1x128xf32> to vector<128x128xf32>
    %32 = arith.addf %29, %31 : vector<128x128xf32>
    %33 = arith.truncf %32 : vector<128x128xf32> to vector<128x128xbf16>
    %34 = arith.negf %33 : vector<128x128xbf16>
    %35 = math.exp %34 : vector<128x128xbf16>
    %cst_18 = arith.constant 1.000000e+00 : bf16
    %36 = vector.broadcast %cst_18 : bf16 to vector<128x128xbf16>
    %37 = arith.addf %36, %35 : vector<128x128xbf16>
    %38 = arith.divf %36, %37 : vector<128x128xbf16>
    %39 = arith.extf %38 : vector<128x128xbf16> to vector<128x128xf32>
    %40 = arith.mulf %32, %39 : vector<128x128xf32>
    %41 = vector.extract_strided_slice %40 {offsets = [0, 0], sizes = [64, 128], strides = [1, 1]} : vector<128x128xf32> to vector<64x128xf32>
    %cst_19 = arith.constant dense<0.000000e+00> : vector<128xf32>
    %42 = vector.multi_reduction <add>, %41, %cst_19 [0] : vector<64x128xf32> to vector<128xf32>
    %43 = vector.shape_cast %42 : vector<128xf32> to vector<1x128xf32>
    %44 = vector.extract_strided_slice %40 {offsets = [64, 0], sizes = [64, 128], strides = [1, 1]} : vector<128x128xf32> to vector<64x128xf32>
    %cst_20 = arith.constant dense<0.000000e+00> : vector<128xf32>
    %45 = vector.multi_reduction <add>, %44, %cst_20 [0] : vector<64x128xf32> to vector<128xf32>
    %46 = vector.shape_cast %45 : vector<128xf32> to vector<1x128xf32>
    %47 = tpu.concatenate %43, %46 in 0 : vector<1x128xf32>, vector<1x128xf32> -> vector<2x128xf32>
    %c0_21 = arith.constant 0 : index
    %c0_22 = arith.constant 0 : index
    %48 = vector.load %arg12[%c0_21, %c0_22] : memref<2x128xf32, #tpu.memory_space<vmem>>, vector<2x128xf32>
    %49 = arith.addf %48, %47 : vector<2x128xf32>
    %c0_23 = arith.constant 0 : index
    %c0_24 = arith.constant 0 : index
    %50 = vector.load %arg12[%c0_23, %c0_24] : memref<2x128xf32, #tpu.memory_space<vmem>>, vector<2x128xf32>
    tpu.vector_store %arg12[%c0_23, %c0_24], %49 {strides = array<i32>} : memref<2x128xf32, #tpu.memory_space<vmem>>, vector<2x128xf32>,
    %c0_i32_25 = arith.constant 0 : i32
    %51 = arith.cmpi eq, %arg1, %c0_i32_25 : i32
    %52 = arith.extui %51 : i1 to i32
    %c0_i32_26 = arith.constant 0 : i32
    %53 = arith.cmpi ne, %52, %c0_i32_26 : i32
    scf.if %53 {
      %c0_27 = arith.constant 0 : index
      %c0_28 = arith.constant 0 : index
      %54 = vector.load %arg12[%c0_27, %c0_28] : memref<2x128xf32, #tpu.memory_space<vmem>>, vector<2x128xf32>
      %cst_29 = arith.constant 1.562500e-02 : f32
      %55 = vector.broadcast %cst_29 : f32 to vector<2x128xf32>
      %56 = arith.mulf %54, %55 : vector<2x128xf32>
      %c0_30 = arith.constant 0 : index
      %c0_31 = arith.constant 0 : index
      %57 = vector.load %arg9[%c0_30, %c0_31] : memref<1x128xf32, #tpu.memory_space<vmem>>, vector<1x128xf32>
      %58 = vector.broadcast %57 : vector<1x128xf32> to vector<2x128xf32>
      %59 = arith.mulf %56, %58 : vector<2x128xf32>
      %cst_32 = arith.constant dense<0.000000e+00> : vector<2xf32>
      %60 = vector.multi_reduction <add>, %59, %cst_32 [1] : vector<2x128xf32> to vector<2xf32>
      %61 = vector.shape_cast %60 : vector<2xf32> to vector<2x1xf32>
      %c0_33 = arith.constant 0 : index
      %c0_34 = arith.constant 0 : index
      %62 = memref.load %arg10[%c0_33, %c0_34] : memref<1x1xf32, #tpu.memory_space<smem>>
      %63 = vector.broadcast %62 : f32 to vector<2x1xf32>
      %64 = arith.addf %61, %63 : vector<2x1xf32>
      %65 = arith.negf %64 : vector<2x1xf32>
      %66 = math.exp %65 : vector<2x1xf32>
      %cst_35 = arith.constant 1.000000e+00 : f32
      %67 = vector.broadcast %cst_35 : f32 to vector<2x1xf32>
      %68 = arith.addf %67, %66 : vector<2x1xf32>
      %69 = arith.divf %67, %68 : vector<2x1xf32>
      %70 = vector.shape_cast %69 : vector<2x1xf32> to vector<1x2x1xf32>
      %71 = vector.shape_cast %70 : vector<1x2x1xf32> to vector<1x2x1xf32>
      %72 = vector.broadcast %71 : vector<1x2x1xf32> to vector<1x2x128xf32>
      %c0_36 = arith.constant 0 : index
      %c0_37 = arith.constant 0 : index
      %c0_38 = arith.constant 0 : index
      %73 = vector.load %arg11[%c0_36, %c0_37, %c0_38] : memref<1x2x128xf32, #tpu.memory_space<vmem>>, vector<1x2x128xf32>
      tpu.vector_store %arg11[%c0_36, %c0_37, %c0_38], %72 {strides = array<i32>} : memref<1x2x128xf32, #tpu.memory_space<vmem>>, vector<1x2x128xf32>,
    } else {
    }
    return
  }
  func.func @transform_0(%arg0: i32, %arg1: i32) -> (i32, i32) {
    %c1_i32 = arith.constant 1 : i32
    %0 = arith.muli %arg0, %c1_i32 : i32
    %1 = arith.addi %0, %arg1 : i32
    %c0_i32 = arith.constant 0 : i32
    %c0_i32_0 = arith.constant 0 : i32
    return %1, %c0_i32 : i32, i32
  }
  func.func @transform_1(%arg0: i32, %arg1: i32) -> (i32, i32) {
    %c0_i32 = arith.constant 0 : i32
    %c0_i32_0 = arith.constant 0 : i32
    %c0_i32_1 = arith.constant 0 : i32
    return %c0_i32, %c0_i32_0 : i32, i32
  }
  func.func @transform_2(%arg0: i32, %arg1: i32) -> (i32, i32) {
    %c0_i32 = arith.constant 0 : i32
    %c0_i32_0 = arith.constant 0 : i32
    %c0_i32_1 = arith.constant 0 : i32
    return %c0_i32, %c0_i32_0 : i32, i32
  }
  func.func @transform_3(%arg0: i32, %arg1: i32) -> (i32, i32) {
    %c0_i32 = arith.constant 0 : i32
    %c0_i32_0 = arith.constant 0 : i32
    %c0_i32_1 = arith.constant 0 : i32
    return %c0_i32, %c0_i32_0 : i32, i32
  }
  func.func @transform_4(%arg0: i32, %arg1: i32) -> (i32, i32) {
    %c0_i32 = arith.constant 0 : i32
    %c0_i32_0 = arith.constant 0 : i32
    %c0_i32_1 = arith.constant 0 : i32
    return %c0_i32, %c0_i32_0 : i32, i32
  }
  func.func @transform_5(%arg0: i32, %arg1: i32) -> (i32, i32) {
    %c0_i32 = arith.constant 0 : i32
    %c0_i32_0 = arith.constant 0 : i32
    %c0_i32_1 = arith.constant 0 : i32
    return %c0_i32, %c0_i32_0 : i32, i32
  }
  func.func @transform_6(%arg0: i32, %arg1: i32) -> (i32, i32) {
    %c0_i32 = arith.constant 0 : i32
    %c0_i32_0 = arith.constant 0 : i32
    %c0_i32_1 = arith.constant 0 : i32
    return %c0_i32, %c0_i32_0 : i32, i32
  }
  func.func @transform_7(%arg0: i32, %arg1: i32) -> (i32, i32) {
    %c0_i32 = arith.constant 0 : i32
    %c0_i32_0 = arith.constant 0 : i32
    %c0_i32_1 = arith.constant 0 : i32
    return %c0_i32, %c0_i32_0 : i32, i32
  }
  func.func @transform_8(%arg0: i32, %arg1: i32) -> (i32, i32) {
    %c0_i32 = arith.constant 0 : i32
    %c0_i32_0 = arith.constant 0 : i32
    %c0_i32_1 = arith.constant 0 : i32
    return %c0_i32, %c0_i32_0 : i32, i32
  }
  func.func @transform_9(%arg0: i32, %arg1: i32) -> (i32, i32, i32) {
    %c0_i32 = arith.constant 0 : i32
    %c0_i32_0 = arith.constant 0 : i32
    %c0_i32_1 = arith.constant 0 : i32
    return %arg0, %c0_i32, %c0_i32_0 : i32, i32, i32
  }
}

</mosaic_0001>

<llo_original>
// kernel: timm_model_forward.1
$region0: #{timm_model_forward.1}
  #allocation0 [shape = 'u32[]', space=smem, size = 0x4, offset = 0x4, fixed_abs, tag = 'smem constant byte address 0x4 - core index']
  #allocation1 [shape = 'u32[144,128]{1,0:T(1,128)}', space=vmem, size = 0x12000, scoped, tag = 'internal scratch']
  #allocation2 [shape = 'f32[2,128]{1,0:T(2,128)}', space=vmem, size = 0x400, scoped, tag = 'scratch operand']
  #allocation3 [shape = 'f32[1,1]{1,0:T(1,128)S(6)}', space=smem, size = 0x200, scoped, tag = 'scoped memory for timm_model_forward.1']
  %s0 = inlined_call_operand.vmem [shape: bf16[128,32], index: 0, kind: input, shape index: {}]
  %s1 = inlined_call_operand.vmem [shape: bf16[32,32], index: 1, kind: input, shape index: {}]
  %s2 = inlined_call_operand.vmem [shape: f32[1,32], index: 2, kind: input, shape index: {}]
  %s3 = inlined_call_operand.vmem [shape: bf16[32,48], index: 3, kind: input, shape index: {}]
  %s4 = inlined_call_operand.vmem [shape: f32[1,48], index: 4, kind: input, shape index: {}]
  %s5 = inlined_call_operand.vmem [shape: bf16[48,128], index: 5, kind: input, shape index: {}]
  %s6 = inlined_call_operand.vmem [shape: f32[1,128], index: 6, kind: input, shape index: {}]
  %s7 = inlined_call_operand.vmem [shape: f32[1,128], index: 7, kind: input, shape index: {}]
  %s8 = inlined_call_operand.<no memory space> [shape: f32[1,1], index: 8, kind: input, shape index: {}]
  %s9 = inlined_call_operand.vmem [shape: f32[1,2,128], index: 9, kind: output, shape index: {}]
  %s10 = sld [smem:[#allocation0]]
  $region54: #{timm_model_forward.1} parent=0
    _
  %s12 = ssub.s32 1, %s10
  %s13 = scalar_select 0, %s12, %s10
  %14 = sst [smem:[#allocation3]] %s8
  // Predicated region
  $region2: #{timm_model_forward.1} parent=0 // pred_check
    _
  $region3: #{timm_model_forward.1} parent=0 // pred_check_branch
    %16 = sbr.rel (0) target = $region5
  $region4: #{timm_model_forward.1} parent=0 // pred_region
    %s17 = sadd.s32 0, 0
    %s18 = smul.u32 16, %s17
    %p19 = scmp.lt.s32.totalorder %s18, 15
    %s20 = scalar_select %p19, %s18, 15
    %s21 = smul.addr %s20, 4
    %s22 = scalar_lea.vmem %s0, %s21
    %s23 = sadd.s32 0, 0
    %s24 = smul.u32 16, %s23
  $region5: #{timm_model_forward.1} parent=0 // pred_fallthru
    _
  // Predicated region
  $region6: #{timm_model_forward.1} parent=0 // pred_check
    _
  $region7: #{timm_model_forward.1} parent=0 // pred_check_branch
    %26 = sbr.rel (0) target = $region9
  $region8: #{timm_model_forward.1} parent=0 // pred_region
    _
  $region9: #{timm_model_forward.1} parent=0 // pred_fallthru
    _
  // Predicated region
  $region10: #{timm_model_forward.1} parent=0 // pred_check
    _
  $region11: #{timm_model_forward.1} parent=0 // pred_check_branch
    %28 = sbr.rel (0) target = $region13
  $region12: #{timm_model_forward.1} parent=0 // pred_region
    _
  $region13: #{timm_model_forward.1} parent=0 // pred_fallthru
    _
  // Predicated region
  $region14: #{timm_model_forward.1} parent=0 // pred_check
    _
  $region15: #{timm_model_forward.1} parent=0 // pred_check_branch
    %30 = sbr.rel (0) target = $region17
  $region16: #{timm_model_forward.1} parent=0 // pred_region
    _
  $region17: #{timm_model_forward.1} parent=0 // pred_fallthru
    _
  // Predicated region
  $region18: #{timm_model_forward.1} parent=0 // pred_check
    _
  $region19: #{timm_model_forward.1} parent=0 // pred_check_branch
    %32 = sbr.rel (0) target = $region21
  $region20: #{timm_model_forward.1} parent=0 // pred_region
    _
  $region21: #{timm_model_forward.1} parent=0 // pred_fallthru
    _
  // Predicated region
  $region22: #{timm_model_forward.1} parent=0 // pred_check
    _
  $region23: #{timm_model_forward.1} parent=0 // pred_check_branch
    %34 = sbr.rel (0) target = $region25
  $region24: #{timm_model_forward.1} parent=0 // pred_region
    _
  $region25: #{timm_model_forward.1} parent=0 // pred_fallthru
    _
  // Predicated region
  $region26: #{timm_model_forward.1} parent=0 // pred_check
    _
  $region27: #{timm_model_forward.1} parent=0 // pred_check_branch
    %36 = sbr.rel (0) target = $region29
  $region28: #{timm_model_forward.1} parent=0 // pred_region
    _
  $region29: #{timm_model_forward.1} parent=0 // pred_fallthru
    _
  // Predicated region
  $region30: #{timm_model_forward.1} parent=0 // pred_check
    _
  $region31: #{timm_model_forward.1} parent=0 // pred_check_branch
    %38 = sbr.rel (0) target = $region33
  $region32: #{timm_model_forward.1} parent=0 // pred_region
    _
  $region33: #{timm_model_forward.1} parent=0 // pred_fallthru
    _
  // Predicated region
  $region34: #{timm_model_forward.1} parent=0 // pred_check
    _
  $region35: #{timm_model_forward.1} parent=0 // pred_check_branch
    %40 = sbr.rel (0) target = $region37
  $region36: #{timm_model_forward.1} parent=0 // pred_region
    _
  $region37: #{timm_model_forward.1} parent=0 // pred_fallthru
    _
  %s41 = sadd.s32 0, 0
  %s42 = smul.u32 16, %s41
  %p43 = scmp.lt.s32.totalorder %s42, 15
  %s44 = scalar_select %p43, %s42, 15
  %s45 = smul.addr %s44, 4
  %s46 = scalar_lea.vmem %s0, %s45
  %s47 = sadd.s32 0, 0
  %s48 = smul.u32 16, %s47
  %p49 = scmp.lt.s32.totalorder %s48, 15
  %s50 = scalar_select %p49, %s48, 15
  %s51 = smul.addr %s50, 4
  %s52 = scalar_lea.vmem %s0, %s51
  %s53 = sadd.s32 0, 0
  %s54 = smul.u32 16, %s53
  %p57 = scmp.eq.s32.totalorder 0, 0
  // Predicated region
  $region38: #{timm_model_forward.1} parent=0 // pred_check
    %p58 = pneg %p57
  $region39: #{timm_model_forward.1} parent=0 // pred_check_branch
    %60 = sbr.rel (%p58) target = $region41
  $region40: #{timm_model_forward.1} parent=0 // pred_region
    %61 = vst [vmem:[#allocation2] sm:$0x3] 0.0
  $region41: #{timm_model_forward.1} parent=0 // pred_fallthru
    _
  %v62 = vld [vmem:[%s52] sm:$0xf]
  %v63 = vld [vmem:[%s52 + $0x4] sm:$0xf]
  %v64 = vld [vmem:[%s52 + $0x8] sm:$0xf]
  %v65 = vld [vmem:[%s52 + $0xc] sm:$0xf]
  %v66 = vld [vmem:[%s52 + $0x10] sm:$0xf]
  %v67 = vld [vmem:[%s52 + $0x14] sm:$0xf]
  %v68 = vld [vmem:[%s52 + $0x18] sm:$0xf]
  %v69 = vld [vmem:[%s52 + $0x1c] sm:$0xf]
  %v70 = vld [vmem:[%s52 + $0x20] sm:$0xf]
  %v71 = vld [vmem:[%s52 + $0x24] sm:$0xf]
  %v72 = vld [vmem:[%s52 + $0x28] sm:$0xf]
  %v73 = vld [vmem:[%s52 + $0x2c] sm:$0xf]
  %v74 = vld [vmem:[%s52 + $0x30] sm:$0xf]
  %v75 = vld [vmem:[%s52 + $0x34] sm:$0xf]
  %v76 = vld [vmem:[%s52 + $0x38] sm:$0xf]
  %v77 = vld [vmem:[%s52 + $0x3c] sm:$0xf]
  %v78 = vld [vmem:[%s1] sm:$0xf]
  %v79 = vld [vmem:[%s1 + $0x4] sm:$0xf]
  %v80 = vld [vmem:[%s1 + $0x8] sm:$0xf]
  %v81 = vld [vmem:[%s1 + $0xc] sm:$0xf]
  %v82 = vld [vmem:[%s2] sm:$0x1]
  %v84 = vlaneseq
  %v85 = vshrl.u32 %v84, 7
  %v86 = vsub.s32 0, %v85
  %v87 = vrot.slane %v82, %v86
  %v105 = vunpack.c.l.b16 %v62
  %v106 = vunpack.c.l.b16 %v63
  %v107 = vunpack.c.l.b16 %v64
  %v108 = vunpack.c.l.b16 %v65
  %v109 = vunpack.c.l.b16 %v66
  %v110 = vunpack.c.l.b16 %v67
  %v111 = vunpack.c.l.b16 %v68
  %v112 = vunpack.c.l.b16 %v69
  %v113 = vunpack.c.l.b16 %v70
  %v114 = vunpack.c.l.b16 %v71
  %v115 = vunpack.c.l.b16 %v72
  %v116 = vunpack.c.l.b16 %v73
  %v117 = vunpack.c.l.b16 %v74
  %v118 = vunpack.c.l.b16 %v75
  %v119 = vunpack.c.l.b16 %v76
  %v120 = vunpack.c.l.b16 %v77
  %v121 = vpack.c.b16 %v106, %v105
  %v122 = vpack.c.b16 %v108, %v107
  %v123 = vpack.c.b16 %v110, %v109
  %v124 = vpack.c.b16 %v112, %v111
  %v125 = vpack.c.b16 %v114, %v113
  %v126 = vpack.c.b16 %v116, %v115
  %v127 = vpack.c.b16 %v118, %v117
  %v128 = vpack.c.b16 %v120, %v119
  %v133 = vunpack.c.l.b16 %v78
  %v134 = vunpack.c.l.b16 %v79
  %v135 = vunpack.c.l.b16 %v80
  %v136 = vunpack.c.l.b16 %v81
  %v137 = vpack.c.b16 %v134, %v133
  %v138 = vpack.c.b16 %v136, %v135
  %vm141 = vcmask 261120
  %v143 = vsel %vm141, %v121, 0
  %v146 = vsel %vm141, %v122, 0
  %v149 = vsel %vm141, %v123, 0
  %v152 = vsel %vm141, %v124, 0
  %v155 = vsel %vm141, %v125, 0
  %v158 = vsel %vm141, %v126, 0
  %v161 = vsel %vm141, %v127, 0
  %v164 = vsel %vm141, %v128, 0
  %166 = vmatprep.subr.bf16.mxu0 0
  %167 = vmatpush1.bf16.msra.mxu0 %v137
  %168 = vmatprep.subr.bf16.mxu0 0
  %169 = vmatpush1.bf16.msra.mxu0 %v138
  %170 = vmatprep.subr.bf16.mxu0 0
  %171 = vmatpush1.bf16.msra.mxu0 0
  %172 = vmatprep.subr.bf16.mxu0 0
  %173 = vmatpush1.bf16.msra.mxu0 0
  %174 = vmatprep.subr.bf16.mxu0 0
  %175 = vmatpush1.bf16.msra.mxu0 0
  %176 = vmatprep.subr.bf16.mxu0 0
  %177 = vmatpush1.bf16.msra.mxu0 0
  %178 = vmatprep.subr.bf16.mxu0 0
  %179 = vmatpush1.bf16.msra.mxu0 0
  %180 = vmatprep.subr.bf16.mxu0 0
  %181 = vmatpush1.bf16.msra.mxu0 0
  %182 = vmatprep.subr.bf16.mxu0 0
  %183 = vmatpush1.bf16.msra.mxu0 0
  %184 = vmatprep.subr.bf16.mxu0 0
  %185 = vmatpush1.bf16.msra.mxu0 0
  %186 = vmatprep.subr.bf16.mxu0 0
  %187 = vmatpush1.bf16.msra.mxu0 0
  %188 = vmatprep.subr.bf16.mxu0 0
  %189 = vmatpush1.bf16.msra.mxu0 0
  %190 = vmatprep.subr.bf16.mxu0 0
  %191 = vmatpush1.bf16.msra.mxu0 0
  %192 = vmatprep.subr.bf16.mxu0 0
  %193 = vmatpush1.bf16.msra.mxu0 0
  %194 = vmatprep.subr.bf16.mxu0 0
  %195 = vmatpush1.bf16.msra.mxu0 0
  %196 = vmatprep.subr.bf16.mxu0 0
  %197 = vmatpush1.bf16.msra.mxu0 0
  %198 = vmatprep.mubr.bf16.mxu0 0
  %199 = vmatmul.mubr.bf16.gmra.mrb[0].mxu0 %v143
  %v200 = vpop.f32.mrb[0].mxu0
  %v201 = vadd.f32 %v87, %v200
  %v202 = vpop.f32.mrb[0].mxu0
  %v203 = vpop.f32.mrb[0].mxu0
  %v204 = vadd.f32 %v87, %v203
  %v205 = vpop.f32.mrb[0].mxu0
  %206 = vmatprep.mubr.bf16.mxu0 0
  %207 = vmatmul.mubr.bf16.gmra.mrb[0].mxu0 %v146
  %v208 = vpop.f32.mrb[0].mxu0
  %v209 = vadd.f32 %v87, %v208
  %v210 = vpop.f32.mrb[0].mxu0
  %v211 = vpop.f32.mrb[0].mxu0
  %v212 = vadd.f32 %v87, %v211
  %v213 = vpop.f32.mrb[0].mxu0
  %214 = vmatprep.mubr.bf16.mxu0 0
  %215 = vmatmul.mubr.bf16.gmra.mrb[0].mxu0 %v149
  %v216 = vpop.f32.mrb[0].mxu0
  %v217 = vadd.f32 %v87, %v216
  %v218 = vpop.f32.mrb[0].mxu0
  %v219 = vpop.f32.mrb[0].mxu0
  %v220 = vadd.f32 %v87, %v219
  %v221 = vpop.f32.mrb[0].mxu0
  %222 = vmatprep.mubr.bf16.mxu0 0
  %223 = vmatmul.mubr.bf16.gmra.mrb[0].mxu0 %v152
  %v224 = vpop.f32.mrb[0].mxu0
  %v225 = vadd.f32 %v87, %v224
  %v226 = vpop.f32.mrb[0].mxu0
  %v227 = vpop.f32.mrb[0].mxu0
  %v228 = vadd.f32 %v87, %v227
  %v229 = vpop.f32.mrb[0].mxu0
  %230 = vmatprep.mubr.bf16.mxu0 0
  %231 = vmatmul.mubr.bf16.gmra.mrb[0].mxu0 %v155
  %v232 = vpop.f32.mrb[0].mxu0
  %v233 = vadd.f32 %v87, %v232
  %v234 = vpop.f32.mrb[0].mxu0
  %v235 = vpop.f32.mrb[0].mxu0
  %v236 = vadd.f32 %v87, %v235
  %v237 = vpop.f32.mrb[0].mxu0
  %238 = vmatprep.mubr.bf16.mxu0 0
  %239 = vmatmul.mubr.bf16.gmra.mrb[0].mxu0 %v158
  %v240 = vpop.f32.mrb[0].mxu0
  %v241 = vadd.f32 %v87, %v240
  %v242 = vpop.f32.mrb[0].mxu0
  %v243 = vpop.f32.mrb[0].mxu0
  %v244 = vadd.f32 %v87, %v243
  %v245 = vpop.f32.mrb[0].mxu0
  %246 = vmatprep.mubr.bf16.mxu0 0
  %247 = vmatmul.mubr.bf16.gmra.mrb[0].mxu0 %v161
  %v248 = vpop.f32.mrb[0].mxu0
  %v249 = vadd.f32 %v87, %v248
  %v250 = vpop.f32.mrb[0].mxu0
  %v251 = vpop.f32.mrb[0].mxu0
  %v252 = vadd.f32 %v87, %v251
  %v253 = vpop.f32.mrb[0].mxu0
  %254 = vmatprep.mubr.bf16.mxu0 0
  %255 = vmatmul.mubr.bf16.gmra.mrb[0].mxu0 %v164
  %v256 = vpop.f32.mrb[0].mxu0
  %v257 = vadd.f32 %v87, %v256
  %v258 = vpop.f32.mrb[0].mxu0
  %v259 = vpop.f32.mrb[0].mxu0
  %v260 = vadd.f32 %v87, %v259
  %v261 = vpop.f32.mrb[0].mxu0
  %262 = vdwg.mxu0
  %v263 = vpack.c.bf16 %v204, %v201
  %v264 = vpack.c.bf16 %v212, %v209
  %v265 = vpack.c.bf16 %v220, %v217
  %v266 = vpack.c.bf16 %v228, %v225
  %v267 = vpack.c.bf16 %v236, %v233
  %v268 = vpack.c.bf16 %v244, %v241
  %v269 = vpack.c.bf16 %v252, %v249
  %v270 = vpack.c.bf16 %v260, %v257
  %v271 = vxor.u32 %v263, 2147516416
  %v272 = vxor.u32 %v264, 2147516416
  %v273 = vxor.u32 %v265, 2147516416
  %v274 = vxor.u32 %v266, 2147516416
  %v275 = vxor.u32 %v267, 2147516416
  %v276 = vxor.u32 %v268, 2147516416
  %v277 = vxor.u32 %v269, 2147516416
  %v278 = vxor.u32 %v270, 2147516416
  %v280 = vmul.bf16 %v271, 1069105081
  %v281 = vpow.bf16.pop %v280
  %v283 = vmul.bf16 %v272, 1069105081
  %v284 = vpow.bf16.pop %v283
  %v286 = vmul.bf16 %v273, 1069105081
  %v287 = vpow.bf16.pop %v286
  %v289 = vmul.bf16 %v274, 1069105081
  %v290 = vpow.bf16.pop %v289
  %v292 = vmul.bf16 %v275, 1069105081
  %v293 = vpow.bf16.pop %v292
  %v295 = vmul.bf16 %v276, 1069105081
  %v296 = vpow.bf16.pop %v295
  %v298 = vmul.bf16 %v277, 1069105081
  %v299 = vpow.bf16.pop %v298
  %v301 = vmul.bf16 %v278, 1069105081
  %v302 = vpow.bf16.pop %v301
  %v303 = vadd.bf16 %v281, 1065369472
  %v304 = vadd.bf16 %v284, 1065369472
  %v305 = vadd.bf16 %v287, 1065369472
  %v306 = vadd.bf16 %v290, 1065369472
  %v307 = vadd.bf16 %v293, 1065369472
  %v308 = vadd.bf16 %v296, 1065369472
  %v309 = vadd.bf16 %v299, 1065369472
  %v310 = vadd.bf16 %v302, 1065369472
  %v311 = vrcp.bf16.pop %v303
  %v312 = vmul.bf16 1065369472, %v311
  %v313 = vrcp.bf16.pop %v304
  %v314 = vmul.bf16 1065369472, %v313
  %v315 = vrcp.bf16.pop %v305
  %v316 = vmul.bf16 1065369472, %v315
  %v317 = vrcp.bf16.pop %v306
  %v318 = vmul.bf16 1065369472, %v317
  %v319 = vrcp.bf16.pop %v307
  %v320 = vmul.bf16 1065369472, %v319
  %v321 = vrcp.bf16.pop %v308
  %v322 = vmul.bf16 1065369472, %v321
  %v323 = vrcp.bf16.pop %v309
  %v324 = vmul.bf16 1065369472, %v323
  %v325 = vrcp.bf16.pop %v310
  %v326 = vmul.bf16 1065369472, %v325
  %v327 = vmul.bf16 %v263, %v312
  %v328 = vmul.bf16 %v264, %v314
  %v329 = vmul.bf16 %v265, %v316
  %v330 = vmul.bf16 %v266, %v318
  %v331 = vmul.bf16 %v267, %v320
  %v332 = vmul.bf16 %v268, %v322
  %v333 = vmul.bf16 %v269, %v324
  %v334 = vmul.bf16 %v270, %v326
  %v335 = vld [vmem:[%s3] sm:$0xf]
  %v336 = vld [vmem:[%s3 + $0x4] sm:$0xf]
  %v337 = vld [vmem:[%s3 + $0x8] sm:$0xf]
  %v338 = vld [vmem:[%s3 + $0xc] sm:$0xf]
  %v339 = vld [vmem:[%s4] sm:$0x1]
  %v341 = vlaneseq
  %v342 = vshrl.u32 %v341, 7
  %v343 = vsub.s32 0, %v342
  %v344 = vrot.slane %v339, %v343
  %v350 = vunpack.c.l.b16 %v335
  %v351 = vunpack.c.l.b16 %v336
  %v352 = vunpack.c.l.b16 %v337
  %v353 = vunpack.c.l.b16 %v338
  %v354 = vpack.c.b16 %v351, %v350
  %v355 = vpack.c.b16 %v353, %v352
  %v359 = vsel %vm141, %v327, 0
  %v362 = vsel %vm141, %v328, 0
  %v365 = vsel %vm141, %v329, 0
  %v368 = vsel %vm141, %v330, 0
  %v371 = vsel %vm141, %v331, 0
  %v374 = vsel %vm141, %v332, 0
  %v377 = vsel %vm141, %v333, 0
  %v380 = vsel %vm141, %v334, 0
  %382 = vmatprep.subr.bf16.mxu0 0
  %383 = vmatpush1.bf16.msra.mxu0 %v354
  %384 = vmatprep.subr.bf16.mxu0 0
  %385 = vmatpush1.bf16.msra.mxu0 %v355
  %386 = vmatprep.subr.bf16.mxu0 0
  %387 = vmatpush1.bf16.msra.mxu0 0
  %388 = vmatprep.subr.bf16.mxu0 0
  %389 = vmatpush1.bf16.msra.mxu0 0
  %390 = vmatprep.subr.bf16.mxu0 0
  %391 = vmatpush1.bf16.msra.mxu0 0
  %392 = vmatprep.subr.bf16.mxu0 0
  %393 = vmatpush1.bf16.msra.mxu0 0
  %394 = vmatprep.subr.bf16.mxu0 0
  %395 = vmatpush1.bf16.msra.mxu0 0
  %396 = vmatprep.subr.bf16.mxu0 0
  %397 = vmatpush1.bf16.msra.mxu0 0
  %398 = vmatprep.subr.bf16.mxu0 0
  %399 = vmatpush1.bf16.msra.mxu0 0
  %400 = vmatprep.subr.bf16.mxu0 0
  %401 = vmatpush1.bf16.msra.mxu0 0
  %402 = vmatprep.subr.bf16.mxu0 0
  %403 = vmatpush1.bf16.msra.mxu0 0
  %404 = vmatprep.subr.bf16.mxu0 0
  %405 = vmatpush1.bf16.msra.mxu0 0
  %406 = vmatprep.subr.bf16.mxu0 0
  %407 = vmatpush1.bf16.msra.mxu0 0
  %408 = vmatprep.subr.bf16.mxu0 0
  %409 = vmatpush1.bf16.msra.mxu0 0
  %410 = vmatprep.subr.bf16.mxu0 0
  %411 = vmatpush1.bf16.msra.mxu0 0
  %412 = vmatprep.subr.bf16.mxu0 0
  %413 = vmatpush1.bf16.msra.mxu0 0
  %414 = vmatprep.mubr.bf16.mxu0 0
  %415 = vmatmul.mubr.bf16.gmra.mrb[0].mxu0 %v359
  %v416 = vpop.f32.mrb[0].mxu0
  %v417 = vadd.f32 %v344, %v416
  %v418 = vpop.f32.mrb[0].mxu0
  %v419 = vpop.f32.mrb[0].mxu0
  %v420 = vadd.f32 %v344, %v419
  %v421 = vpop.f32.mrb[0].mxu0
  %422 = vmatprep.mubr.bf16.mxu0 0
  %423 = vmatmul.mubr.bf16.gmra.mrb[0].mxu0 %v362
  %v424 = vpop.f32.mrb[0].mxu0
  %v425 = vadd.f32 %v344, %v424
  %v426 = vpop.f32.mrb[0].mxu0
  %v427 = vpop.f32.mrb[0].mxu0
  %v428 = vadd.f32 %v344, %v427
  %v429 = vpop.f32.mrb[0].mxu0
  %430 = vmatprep.mubr.bf16.mxu0 0
  %431 = vmatmul.mubr.bf16.gmra.mrb[0].mxu0 %v365
  %v432 = vpop.f32.mrb[0].mxu0
  %v433 = vadd.f32 %v344, %v432
  %v434 = vpop.f32.mrb[0].mxu0
  %v435 = vpop.f32.mrb[0].mxu0
  %v436 = vadd.f32 %v344, %v435
  %v437 = vpop.f32.mrb[0].mxu0
  %438 = vmatprep.mubr.bf16.mxu0 0
  %439 = vmatmul.mubr.bf16.gmra.mrb[0].mxu0 %v368
  %v440 = vpop.f32.mrb[0].mxu0
  %v441 = vadd.f32 %v344, %v440
  %v442 = vpop.f32.mrb[0].mxu0
  %v443 = vpop.f32.mrb[0].mxu0
  %v444 = vadd.f32 %v344, %v443
  %v445 = vpop.f32.mrb[0].mxu0
  %446 = vmatprep.mubr.bf16.mxu0 0
  %447 = vmatmul.mubr.bf16.gmra.mrb[0].mxu0 %v371
  %v448 = vpop.f32.mrb[0].mxu0
  %v449 = vadd.f32 %v344, %v448
  %v450 = vpop.f32.mrb[0].mxu0
  %v451 = vpop.f32.mrb[0].mxu0
  %v452 = vadd.f32 %v344, %v451
  %v453 = vpop.f32.mrb[0].mxu0
  %454 = vmatprep.mubr.bf16.mxu0 0
  %455 = vmatmul.mubr.bf16.gmra.mrb[0].mxu0 %v374
  %v456 = vpop.f32.mrb[0].mxu0
  %v457 = vadd.f32 %v344, %v456
  %v458 = vpop.f32.mrb[0].mxu0
  %v459 = vpop.f32.mrb[0].mxu0
  %v460 = vadd.f32 %v344, %v459
  %v461 = vpop.f32.mrb[0].mxu0
  %462 = vmatprep.mubr.bf16.mxu0 0
  %463 = vmatmul.mubr.bf16.gmra.mrb[0].mxu0 %v377
  %v464 = vpop.f32.mrb[0].mxu0
  %v465 = vadd.f32 %v344, %v464
  %v466 = vpop.f32.mrb[0].mxu0
  %v467 = vpop.f32.mrb[0].mxu0
  %v468 = vadd.f32 %v344, %v467
  %v469 = vpop.f32.mrb[0].mxu0
  %470 = vmatprep.mubr.bf16.mxu0 0
  %471 = vmatmul.mubr.bf16.gmra.mrb[0].mxu0 %v380
  %v472 = vpop.f32.mrb[0].mxu0
  %v473 = vadd.f32 %v344, %v472
  %v474 = vpop.f32.mrb[0].mxu0
  %v475 = vpop.f32.mrb[0].mxu0
  %v476 = vadd.f32 %v344, %v475
  %v477 = vpop.f32.mrb[0].mxu0
  %478 = vdwg.mxu0
  %v479 = vpack.c.bf16 %v420, %v417
  %v480 = vpack.c.bf16 %v428, %v425
  %v481 = vpack.c.bf16 %v436, %v433
  %v482 = vpack.c.bf16 %v444, %v441
  %v483 = vpack.c.bf16 %v452, %v449
  %v484 = vpack.c.bf16 %v460, %v457
  %v485 = vpack.c.bf16 %v468, %v465
  %v486 = vpack.c.bf16 %v476, %v473
  %v487 = vxor.u32 %v479, 2147516416
  %v488 = vxor.u32 %v480, 2147516416
  %v489 = vxor.u32 %v481, 2147516416
  %v490 = vxor.u32 %v482, 2147516416
  %v491 = vxor.u32 %v483, 2147516416
  %v492 = vxor.u32 %v484, 2147516416
  %v493 = vxor.u32 %v485, 2147516416
  %v494 = vxor.u32 %v486, 2147516416
  %v496 = vmul.bf16 %v487, 1069105081
  %v497 = vpow.bf16.pop %v496
  %v499 = vmul.bf16 %v488, 1069105081
  %v500 = vpow.bf16.pop %v499
  %v502 = vmul.bf16 %v489, 1069105081
  %v503 = vpow.bf16.pop %v502
  %v505 = vmul.bf16 %v490, 1069105081
  %v506 = vpow.bf16.pop %v505
  %v508 = vmul.bf16 %v491, 1069105081
  %v509 = vpow.bf16.pop %v508
  %v511 = vmul.bf16 %v492, 1069105081
  %v512 = vpow.bf16.pop %v511
  %v514 = vmul.bf16 %v493, 1069105081
  %v515 = vpow.bf16.pop %v514
  %v517 = vmul.bf16 %v494, 1069105081
  %v518 = vpow.bf16.pop %v517
  %v519 = vadd.bf16 %v497, 1065369472
  %v520 = vadd.bf16 %v500, 1065369472
  %v521 = vadd.bf16 %v503, 1065369472
  %v522 = vadd.bf16 %v506, 1065369472
  %v523 = vadd.bf16 %v509, 1065369472
  %v524 = vadd.bf16 %v512, 1065369472
  %v525 = vadd.bf16 %v515, 1065369472
  %v526 = vadd.bf16 %v518, 1065369472
  %v527 = vrcp.bf16.pop %v519
  %v528 = vmul.bf16 1065369472, %v527
  %v529 = vrcp.bf16.pop %v520
  %v530 = vmul.bf16 1065369472, %v529
  %v531 = vrcp.bf16.pop %v521
  %v532 = vmul.bf16 1065369472, %v531
  %v533 = vrcp.bf16.pop %v522
  %v534 = vmul.bf16 1065369472, %v533
  %v535 = vrcp.bf16.pop %v523
  %v536 = vmul.bf16 1065369472, %v535
  %v537 = vrcp.bf16.pop %v524
  %v538 = vmul.bf16 1065369472, %v537
  %v539 = vrcp.bf16.pop %v525
  %v540 = vmul.bf16 1065369472, %v539
  %v541 = vrcp.bf16.pop %v526
  %v542 = vmul.bf16 1065369472, %v541
  %v543 = vmul.bf16 %v479, %v528
  %v544 = vmul.bf16 %v480, %v530
  %v545 = vmul.bf16 %v481, %v532
  %v546 = vmul.bf16 %v482, %v534
  %v547 = vmul.bf16 %v483, %v536
  %v548 = vmul.bf16 %v484, %v538
  %v549 = vmul.bf16 %v485, %v540
  %v550 = vmul.bf16 %v486, %v542
  %v551 = vld [vmem:[%s5] sm:$0xf]
  %v552 = vld [vmem:[%s5 + $0x4] sm:$0xf]
  %v553 = vld [vmem:[%s5 + $0x8] sm:$0xf]
  %v554 = vld [vmem:[%s5 + $0xc] sm:$0xf]
  %v555 = vld [vmem:[%s5 + $0x10] sm:$0xf]
  %v556 = vld [vmem:[%s5 + $0x14] sm:$0xf]
  %v557 = vld [vmem:[%s6] sm:$0x1]
  %v559 = vlaneseq
  %v560 = vshrl.u32 %v559, 7
  %v561 = vsub.s32 0, %v560
  %v562 = vrot.slane %v557, %v561
  %v570 = vunpack.c.l.b16 %v551
  %v571 = vunpack.c.l.b16 %v552
  %v572 = vunpack.c.l.b16 %v553
  %v573 = vunpack.c.l.b16 %v554
  %v574 = vunpack.c.l.b16 %v555
  %v575 = vunpack.c.l.b16 %v556
  %v576 = vpack.c.b16 %v571, %v570
  %v577 = vpack.c.b16 %v573, %v572
  %v578 = vpack.c.b16 %v575, %v574
  %vm582 = vcmask 392192
  %v584 = vsel %vm582, %v543, 0
  %v587 = vsel %vm582, %v544, 0
  %v590 = vsel %vm582, %v545, 0
  %v593 = vsel %vm582, %v546, 0
  %v596 = vsel %vm582, %v547, 0
  %v599 = vsel %vm582, %v548, 0
  %v602 = vsel %vm582, %v549, 0
  %v605 = vsel %vm582, %v550, 0
  %607 = vmatprep.subr.bf16.mxu0 0
  %608 = vmatpush1.bf16.msra.mxu0 %v576
  %609 = vmatprep.subr.bf16.mxu0 0
  %610 = vmatpush1.bf16.msra.mxu0 %v577
  %611 = vmatprep.subr.bf16.mxu0 0
  %612 = vmatpush1.bf16.msra.mxu0 %v578
  %613 = vmatprep.subr.bf16.mxu0 0
  %614 = vmatpush1.bf16.msra.mxu0 0
  %615 = vmatprep.subr.bf16.mxu0 0
  %616 = vmatpush1.bf16.msra.mxu0 0
  %617 = vmatprep.subr.bf16.mxu0 0
  %618 = vmatpush1.bf16.msra.mxu0 0
  %619 = vmatprep.subr.bf16.mxu0 0
  %620 = vmatpush1.bf16.msra.mxu0 0
  %621 = vmatprep.subr.bf16.mxu0 0
  %622 = vmatpush1.bf16.msra.mxu0 0
  %623 = vmatprep.subr.bf16.mxu0 0
  %624 = vmatpush1.bf16.msra.mxu0 0
  %625 = vmatprep.subr.bf16.mxu0 0
  %626 = vmatpush1.bf16.msra.mxu0 0
  %627 = vmatprep.subr.bf16.mxu0 0
  %628 = vmatpush1.bf16.msra.mxu0 0
  %629 = vmatprep.subr.bf16.mxu0 0
  %630 = vmatpush1.bf16.msra.mxu0 0
  %631 = vmatprep.subr.bf16.mxu0 0
  %632 = vmatpush1.bf16.msra.mxu0 0
  %633 = vmatprep.subr.bf16.mxu0 0
  %634 = vmatpush1.bf16.msra.mxu0 0
  %635 = vmatprep.subr.bf16.mxu0 0
  %636 = vmatpush1.bf16.msra.mxu0 0
  %637 = vmatprep.subr.bf16.mxu0 0
  %638 = vmatpush1.bf16.msra.mxu0 0
  %639 = vmatprep.mubr.bf16.mxu0 0
  %640 = vmatmul.mubr.bf16.gmra.mrb[0].mxu0 %v584
  %v641 = vpop.f32.mrb[0].mxu0
  %v642 = vadd.f32 %v562, %v641
  %v643 = vpop.f32.mrb[0].mxu0
  %v644 = vpop.f32.mrb[0].mxu0
  %v645 = vadd.f32 %v562, %v644
  %v646 = vpop.f32.mrb[0].mxu0
  %647 = vmatprep.mubr.bf16.mxu0 0
  %648 = vmatmul.mubr.bf16.gmra.mrb[0].mxu0 %v587
  %v649 = vpop.f32.mrb[0].mxu0
  %v650 = vadd.f32 %v562, %v649
  %v651 = vpop.f32.mrb[0].mxu0
  %v652 = vpop.f32.mrb[0].mxu0
  %v653 = vadd.f32 %v562, %v652
  %v654 = vpop.f32.mrb[0].mxu0
  %655 = vmatprep.mubr.bf16.mxu0 0
  %656 = vmatmul.mubr.bf16.gmra.mrb[0].mxu0 %v590
  %v657 = vpop.f32.mrb[0].mxu0
  %v658 = vadd.f32 %v562, %v657
  %v659 = vpop.f32.mrb[0].mxu0
  %v660 = vpop.f32.mrb[0].mxu0
  %v661 = vadd.f32 %v562, %v660
  %v662 = vpop.f32.mrb[0].mxu0
  %663 = vmatprep.mubr.bf16.mxu0 0
  %664 = vmatmul.mubr.bf16.gmra.mrb[0].mxu0 %v593
  %v665 = vpop.f32.mrb[0].mxu0
  %v666 = vadd.f32 %v562, %v665
  %v667 = vpop.f32.mrb[0].mxu0
  %v668 = vpop.f32.mrb[0].mxu0
  %v669 = vadd.f32 %v562, %v668
  %v670 = vpop.f32.mrb[0].mxu0
  %671 = vmatprep.mubr.bf16.mxu0 0
  %672 = vmatmul.mubr.bf16.gmra.mrb[0].mxu0 %v596
  %v673 = vpop.f32.mrb[0].mxu0
  %v674 = vadd.f32 %v562, %v673
  %v675 = vpop.f32.mrb[0].mxu0
  %v676 = vpop.f32.mrb[0].mxu0
  %v677 = vadd.f32 %v562, %v676
  %v678 = vpop.f32.mrb[0].mxu0
  %679 = vmatprep.mubr.bf16.mxu0 0
  %680 = vmatmul.mubr.bf16.gmra.mrb[0].mxu0 %v599
  %v681 = vpop.f32.mrb[0].mxu0
  %v682 = vadd.f32 %v562, %v681
  %v683 = vpop.f32.mrb[0].mxu0
  %v684 = vpop.f32.mrb[0].mxu0
  %v685 = vadd.f32 %v562, %v684
  %v686 = vpop.f32.mrb[0].mxu0
  %687 = vmatprep.mubr.bf16.mxu0 0
  %688 = vmatmul.mubr.bf16.gmra.mrb[0].mxu0 %v602
  %v689 = vpop.f32.mrb[0].mxu0
  %v690 = vadd.f32 %v562, %v689
  %v691 = vpop.f32.mrb[0].mxu0
  %v692 = vpop.f32.mrb[0].mxu0
  %v693 = vadd.f32 %v562, %v692
  %v694 = vpop.f32.mrb[0].mxu0
  %695 = vmatprep.mubr.bf16.mxu0 0
  %696 = vmatmul.mubr.bf16.gmra.mrb[0].mxu0 %v605
  %v697 = vpop.f32.mrb[0].mxu0
  %v698 = vadd.f32 %v562, %v697
  %v699 = vpop.f32.mrb[0].mxu0
  %v700 = vpop.f32.mrb[0].mxu0
  %v701 = vadd.f32 %v562, %v700
  %v702 = vpop.f32.mrb[0].mxu0
  %703 = vdwg.mxu0
  %v704 = vpack.c.bf16 %v645, %v642
  %v705 = vpack.c.bf16 %v653, %v650
  %v706 = vpack.c.bf16 %v661, %v658
  %v707 = vpack.c.bf16 %v669, %v666
  %v708 = vpack.c.bf16 %v677, %v674
  %v709 = vpack.c.bf16 %v685, %v682
  %v710 = vpack.c.bf16 %v693, %v690
  %v711 = vpack.c.bf16 %v701, %v698
  %v712 = vxor.u32 %v704, 2147516416
  %v713 = vxor.u32 %v705, 2147516416
  %v714 = vxor.u32 %v706, 2147516416
  %v715 = vxor.u32 %v707, 2147516416
  %v716 = vxor.u32 %v708, 2147516416
  %v717 = vxor.u32 %v709, 2147516416
  %v718 = vxor.u32 %v710, 2147516416
  %v719 = vxor.u32 %v711, 2147516416
  %v721 = vmul.bf16 %v712, 1069105081
  %v722 = vpow.bf16.pop %v721
  %v724 = vmul.bf16 %v713, 1069105081
  %v725 = vpow.bf16.pop %v724
  %v727 = vmul.bf16 %v714, 1069105081
  %v728 = vpow.bf16.pop %v727
  %v730 = vmul.bf16 %v715, 1069105081
  %v731 = vpow.bf16.pop %v730
  %v733 = vmul.bf16 %v716, 1069105081
  %v734 = vpow.bf16.pop %v733
  %v736 = vmul.bf16 %v717, 1069105081
  %v737 = vpow.bf16.pop %v736
  %v739 = vmul.bf16 %v718, 1069105081
  %v740 = vpow.bf16.pop %v739
  %v742 = vmul.bf16 %v719, 1069105081
  %v743 = vpow.bf16.pop %v742
  %v744 = vadd.bf16 %v722, 1065369472
  %v745 = vadd.bf16 %v725, 1065369472
  %v746 = vadd.bf16 %v728, 1065369472
  %v747 = vadd.bf16 %v731, 1065369472
  %v748 = vadd.bf16 %v734, 1065369472
  %v749 = vadd.bf16 %v737, 1065369472
  %v750 = vadd.bf16 %v740, 1065369472
  %v751 = vadd.bf16 %v743, 1065369472
  %v752 = vrcp.bf16.pop %v744
  %v753 = vmul.bf16 1065369472, %v752
  %v754 = vrcp.bf16.pop %v745
  %v755 = vmul.bf16 1065369472, %v754
  %v756 = vrcp.bf16.pop %v746
  %v757 = vmul.bf16 1065369472, %v756
  %v758 = vrcp.bf16.pop %v747
  %v759 = vmul.bf16 1065369472, %v758
  %v760 = vrcp.bf16.pop %v748
  %v761 = vmul.bf16 1065369472, %v760
  %v762 = vrcp.bf16.pop %v749
  %v763 = vmul.bf16 1065369472, %v762
  %v764 = vrcp.bf16.pop %v750
  %v765 = vmul.bf16 1065369472, %v764
  %v766 = vrcp.bf16.pop %v751
  %v767 = vmul.bf16 1065369472, %v766
  %v768 = vunpack.c.l.bf16 %v753
  %v769 = vunpack.c.h.bf16 %v753
  %v770 = vunpack.c.l.bf16 %v755
  %v771 = vunpack.c.h.bf16 %v755
  %v772 = vunpack.c.l.bf16 %v757
  %v773 = vunpack.c.h.bf16 %v757
  %v774 = vunpack.c.l.bf16 %v759
  %v775 = vunpack.c.h.bf16 %v759
  %v776 = vunpack.c.l.bf16 %v761
  %v777 = vunpack.c.h.bf16 %v761
  %v778 = vunpack.c.l.bf16 %v763
  %v779 = vunpack.c.h.bf16 %v763
  %v780 = vunpack.c.l.bf16 %v765
  %v781 = vunpack.c.h.bf16 %v765
  %v782 = vunpack.c.l.bf16 %v767
  %v783 = vunpack.c.h.bf16 %v767
  %v784 = vmul.f32 %v642, %v768
  %v785 = vmul.f32 %v645, %v769
  %v786 = vmul.f32 %v650, %v770
  %v787 = vmul.f32 %v653, %v771
  %v788 = vmul.f32 %v658, %v772
  %v789 = vmul.f32 %v661, %v773
  %v790 = vmul.f32 %v666, %v774
  %v791 = vmul.f32 %v669, %v775
  %v792 = vmul.f32 %v674, %v776
  %v793 = vmul.f32 %v677, %v777
  %v794 = vmul.f32 %v682, %v778
  %v795 = vmul.f32 %v685, %v779
  %v796 = vmul.f32 %v690, %v780
  %v797 = vmul.f32 %v693, %v781
  %v798 = vmul.f32 %v698, %v782
  %v799 = vmul.f32 %v701, %v783
  %v800 = vadd.f32 %v784, %v785
  %v801 = vadd.f32 %v800, %v786
  %v802 = vadd.f32 %v801, %v787
  %v803 = vadd.f32 %v802, %v788
  %v804 = vadd.f32 %v803, %v789
  %v805 = vadd.f32 %v804, %v790
  %v806 = vadd.f32 %v805, %v791
  %v807 = vrot.slane %v806, 4
  %v808 = vadd.f32 %v806, %v807
  %v809 = vrot.slane %v808, 2
  %v810 = vadd.f32 %v808, %v809
  %v811 = vrot.slane %v810, 1
  %v812 = vadd.f32 %v810, %v811
  %v813 = vadd.f32 %v792, %v793
  %v814 = vadd.f32 %v813, %v794
  %v815 = vadd.f32 %v814, %v795
  %v816 = vadd.f32 %v815, %v796
  %v817 = vadd.f32 %v816, %v797
  %v818 = vadd.f32 %v817, %v798
  %v819 = vadd.f32 %v818, %v799
  %v820 = vrot.slane %v819, 4
  %v821 = vadd.f32 %v819, %v820
  %v822 = vrot.slane %v821, 2
  %v823 = vadd.f32 %v821, %v822
  %v824 = vrot.slane %v823, 1
  %v825 = vadd.f32 %v823, %v824
  %vm826 = vcmask 1040384
  %v827 = vsel %vm826, %v812, %v825
  %v828 = vld [vmem:[#allocation2] sm:$0x3]
  %v829 = vadd.f32 %v828, %v827
  %830 = vst [vmem:[#allocation2] sm:$0x3] %v829
  // Predicated region
  $region42: #{timm_model_forward.1} parent=0 // pred_check
    %p831 = pneg %p57
  $region43: #{timm_model_forward.1} parent=0 // pred_check_branch
    %833 = sbr.rel (%p831) target = $region45
  $region44: #{timm_model_forward.1} parent=0 // pred_region
    %v834 = vld [vmem:[#allocation2] sm:$0x3]
    %v835 = vmul.f32 %v834, 0.015625
    %v836 = vld [vmem:[%s7] sm:$0x1]
    %v838 = vlaneseq
    %v839 = vshrl.u32 %v838, 7
    %v840 = vsub.s32 0, %v839
    %v841 = vrot.slane %v836, %v840
    %v843 = vmul.f32 %v835, %v841
    %vm844 = vcmask 1041408
    %v845 = vsel %vm844, %v843, 0.0
    %846 = vadd.xlane.f32.xlu0 %v845
    %v847 = vpop.xlane.xlu0 %846
    %s848 = sld [smem:[#allocation3]]
    %v849 = vstv %s848
    %v850 = vadd.f32 %v847, %v849
    %v851 = vxor.u32 %v850, 2147483648
    %v852 = vmul.f32 %v851, 1.442695
    %v853 = vpow.pop %v852
    %v854 = vadd.f32 %v853, 1.0
    %v855 = vrcp.pop %v854
    %v856 = vmul.f32 1.0, %v855
    %857 = vst [vmem:[%s9] sm:$0x3] %v856
  $region45: #{timm_model_forward.1} parent=0 // pred_fallthru
    _
  // Predicated region
  $region46: #{timm_model_forward.1} parent=0 // pred_check
    _
  $region47: #{timm_model_forward.1} parent=0 // pred_check_branch
    %859 = sbr.rel (0) target = $region49
  $region48: #{timm_model_forward.1} parent=0 // pred_region
    _
  $region49: #{timm_model_forward.1} parent=0 // pred_fallthru
    _
  // Predicated region
  $region50: #{timm_model_forward.1} parent=0 // pred_check
    _
  $region51: #{timm_model_forward.1} parent=0 // pred_check_branch
    %861 = sbr.rel (0) target = $region53
  $region52: #{timm_model_forward.1} parent=0 // pred_region
    _
  $region53: #{timm_model_forward.1} parent=0 // pred_fallthru
    _

</llo_original>
